<compile_context>
chip_gen: v5e
topology: v5e:2x2
jax: 0.10.0
libtpu: 0.0.40
codegen_flags: <defaults>
</compile_context>

<pallas_src>
import functools

import jax
import jax.numpy as jnp
from jax.experimental import pallas as pl
from jax.experimental.pallas import tpu as pltpu


def _round_up(x, m):
    return ((x + m - 1) // m) * m


def _residual_mlp_kernel(x_ref, w1_ref, b1_ref, w2_ref, b2_ref, o_ref):
    # x_ref: (TM, Dp)  w1_ref: (Dp, Hp)  b1_ref: (1, Hp)
    # w2_ref: (Hp, Dp) b2_ref: (1, Dp)   o_ref: (TM, Dp)
    x = x_ref[...]
    h = jnp.dot(x, w1_ref[...], preferred_element_type=jnp.float32) + b1_ref[...]
    h = jax.nn.gelu(h)
    y = (jnp.dot(h.astype(w2_ref.dtype), w2_ref[...],
                 preferred_element_type=jnp.float32) + b2_ref[...])
    # Residual connection fused on the store path: fn(x) + x  (f32 add, then cast)
    o_ref[...] = (y + x.astype(jnp.float32)).astype(o_ref.dtype)


def residual_mlp(x, w1, b1, w2, b2, *, tm=256):
    """out = MLP(x) + x, with x of shape (B, N, D)."""
    B, N, D = x.shape
    H = w1.shape[1]
    M = B * N

    # Lane-dense feature dims (multiples of 128); sublane-aligned token dim.
    Dp = _round_up(D, 128)
    Hp = _round_up(H, 128)
    TM = min(tm, _round_up(M, 8))
    Mp = _round_up(M, TM)

    x2d = x.reshape(M, D)
    x_p = jnp.pad(x2d, ((0, Mp - M), (0, Dp - D)))
    w1_p = jnp.pad(w1, ((0, Dp - D), (0, Hp - H)))
    b1_p = jnp.pad(b1, ((0, 0), (0, Hp - H)))
    w2_p = jnp.pad(w2, ((0, Hp - H), (0, Dp - D)))
    b2_p = jnp.pad(b2, ((0, 0), (0, Dp - D)))

    grid = (Mp // TM,)

    cost = pl.CostEstimate(
        flops=2 * Mp * (Dp * Hp + Hp * Dp),
        transcendentals=Mp * Hp,
        bytes_accessed=4 * (Mp * Dp * 2 + Dp * Hp + Hp * Dp + Hp + Dp),
    )

    out_p = pl.pallas_call(
        _residual_mlp_kernel,
        out_shape=jax.ShapeDtypeStruct((Mp, Dp), x.dtype),
        grid_spec=pltpu.PrefetchScalarGridSpec(
            num_scalar_prefetch=0,
            grid=grid,
            in_specs=[
                pl.BlockSpec((TM, Dp), lambda i: (i, 0)),   # x tile (pipelined)
                pl.BlockSpec((Dp, Hp), lambda i: (0, 0)),   # w1 resident
                pl.BlockSpec((1, Hp), lambda i: (0, 0)),    # b1 resident
                pl.BlockSpec((Hp, Dp), lambda i: (0, 0)),   # w2 resident
                pl.BlockSpec((1, Dp), lambda i: (0, 0)),    # b2 resident
            ],
            out_specs=pl.BlockSpec((TM, Dp), lambda i: (i, 0)),
        ),
        compiler_params=pltpu.CompilerParams(
            dimension_semantics=("parallel",),
            vmem_limit_bytes=48 * 1024 * 1024,
        ),
        cost_estimate=cost,
    )(x_p, w1_p, b1_p, w2_p, b2_p)

    return out_p[:M, :D].reshape(B, N, D)


if __name__ == "__main__":
    key = jax.random.PRNGKey(0)
    k_x, k_w1, k_b1, k_w2, k_b2 = jax.random.split(key, 5)

    B, N, D, Hdim = 2, 8, 32, 64  # small shapes consistent with a token MLP

    x = jax.random.normal(k_x, (B, N, D), dtype=jnp.float32)
    w1 = jax.random.normal(k_w1, (D, Hdim), dtype=jnp.float32) * 0.05
    b1 = jax.random.normal(k_b1, (1, Hdim), dtype=jnp.float32) * 0.01
    w2 = jax.random.normal(k_w2, (Hdim, D), dtype=jnp.float32) * 0.05
    b2 = jax.random.normal(k_b2, (1, D), dtype=jnp.float32) * 0.01

    out = residual_mlp(x, w1, b1, w2, b2)
    jax.block_until_ready(out)

    # Pure-JAX reference for the same fused computation (fn(x) + x).
    ref = (jax.nn.gelu(x.reshape(-1, D) @ w1 + b1) @ w2 + b2
           + x.reshape(-1, D)).reshape(B, N, D)
    assert jnp.allclose(out, ref, atol=1e-4, rtol=1e-4), "mismatch vs reference"

    print("KERNEL_OK")
</pallas_src>

<mosaic_0001>
module attributes {stable_mosaic.version = 11 : i64} {
  func.func @_residual_mlp_kernel(%arg0: i32, %arg1: memref<16x128xf32, #tpu.memory_space<vmem>>, %arg2: memref<128x128xf32, #tpu.memory_space<vmem>>, %arg3: memref<1x128xf32, #tpu.memory_space<vmem>>, %arg4: memref<128x128xf32, #tpu.memory_space<vmem>>, %arg5: memref<1x128xf32, #tpu.memory_space<vmem>>, %arg6: memref<16x128xf32, #tpu.memory_space<vmem>>) attributes {dimension_semantics = [#tpu.dimension_semantics<parallel>], iteration_bounds = array<i64: 1>, scalar_prefetch = 0 : i64, scratch_operands = 0 : i64, tpu.core_type = #tpu.core_type<tc>, window_params = [{transform_indices = @transform_0, window_bounds = array<i64: 16, 128>}, {pipeline_mode = #tpu.pipeline_mode<synchronous>, transform_indices = @transform_1, window_bounds = array<i64: 128, 128>}, {pipeline_mode = #tpu.pipeline_mode<synchronous>, transform_indices = @transform_2, window_bounds = array<i64: 1, 128>}, {pipeline_mode = #tpu.pipeline_mode<synchronous>, transform_indices = @transform_3, window_bounds = array<i64: 128, 128>}, {pipeline_mode = #tpu.pipeline_mode<synchronous>, transform_indices = @transform_4, window_bounds = array<i64: 1, 128>}, {transform_indices = @transform_5, window_bounds = array<i64: 16, 128>}]} {
    %c0 = arith.constant 0 : index
    %c0_0 = arith.constant 0 : index
    %0 = vector.load %arg1[%c0, %c0_0] : memref<16x128xf32, #tpu.memory_space<vmem>>, vector<16x128xf32>
    %c0_1 = arith.constant 0 : index
    %c0_2 = arith.constant 0 : index
    %1 = vector.load %arg2[%c0_1, %c0_2] : memref<128x128xf32, #tpu.memory_space<vmem>>, vector<128x128xf32>
    %cst = arith.constant dense<0.000000e+00> : vector<16x128xf32>
    %2 = tpu.matmul %0, %1, %cst {dimension_numbers = #tpu.dot_dimension_numbers<[1], [0], [0], [1], [0, 0, 1, 1], [], []>} : vector<16x128xf32>, vector<128x128xf32>, vector<16x128xf32> -> vector<16x128xf32>
    %c0_3 = arith.constant 0 : index
    %c0_4 = arith.constant 0 : index
    %3 = vector.load %arg3[%c0_3, %c0_4] : memref<1x128xf32, #tpu.memory_space<vmem>>, vector<1x128xf32>
    %4 = vector.broadcast %3 : vector<1x128xf32> to vector<16x128xf32>
    %5 = arith.addf %2, %4 : vector<16x128xf32>
    %6 = arith.mulf %5, %5 : vector<16x128xf32>
    %7 = arith.mulf %5, %6 : vector<16x128xf32>
    %cst_5 = arith.constant 4.471500e-02 : f32
    %8 = vector.broadcast %cst_5 : f32 to vector<16x128xf32>
    %9 = arith.mulf %8, %7 : vector<16x128xf32>
    %10 = arith.addf %5, %9 : vector<16x128xf32>
    %cst_6 = arith.constant 0.797884583 : f32
    %11 = vector.broadcast %cst_6 : f32 to vector<16x128xf32>
    %12 = arith.mulf %11, %10 : vector<16x128xf32>
    %13 = math.tanh %12 : vector<16x128xf32>
    %cst_7 = arith.constant 1.000000e+00 : f32
    %14 = vector.broadcast %cst_7 : f32 to vector<16x128xf32>
    %15 = arith.addf %14, %13 : vector<16x128xf32>
    %cst_8 = arith.constant 5.000000e-01 : f32
    %16 = vector.broadcast %cst_8 : f32 to vector<16x128xf32>
    %17 = arith.mulf %16, %15 : vector<16x128xf32>
    %18 = arith.mulf %5, %17 : vector<16x128xf32>
    %c0_9 = arith.constant 0 : index
    %c0_10 = arith.constant 0 : index
    %19 = vector.load %arg4[%c0_9, %c0_10] : memref<128x128xf32, #tpu.memory_space<vmem>>, vector<128x128xf32>
    %cst_11 = arith.constant dense<0.000000e+00> : vector<16x128xf32>
    %20 = tpu.matmul %18, %19, %cst_11 {dimension_numbers = #tpu.dot_dimension_numbers<[1], [0], [0], [1], [0, 0, 1, 1], [], []>} : vector<16x128xf32>, vector<128x128xf32>, vector<16x128xf32> -> vector<16x128xf32>
    %c0_12 = arith.constant 0 : index
    %c0_13 = arith.constant 0 : index
    %21 = vector.load %arg5[%c0_12, %c0_13] : memref<1x128xf32, #tpu.memory_space<vmem>>, vector<1x128xf32>
    %22 = vector.broadcast %21 : vector<1x128xf32> to vector<16x128xf32>
    %23 = arith.addf %20, %22 : vector<16x128xf32>
    %24 = arith.addf %23, %0 : vector<16x128xf32>
    %c0_14 = arith.constant 0 : index
    %c0_15 = arith.constant 0 : index
    %25 = vector.load %arg6[%c0_14, %c0_15] : memref<16x128xf32, #tpu.memory_space<vmem>>, vector<16x128xf32>
    tpu.vector_store %arg6[%c0_14, %c0_15], %24 {strides = array<i32>} : memref<16x128xf32, #tpu.memory_space<vmem>>, vector<16x128xf32>,
    return
  }
  func.func @transform_0(%arg0: i32) -> (i32, i32) {
    %c0_i32 = arith.constant 0 : i32
    %c0_i32_0 = arith.constant 0 : i32
    return %arg0, %c0_i32 : i32, i32
  }
  func.func @transform_1(%arg0: i32) -> (i32, i32) {
    %c0_i32 = arith.constant 0 : i32
    %c0_i32_0 = arith.constant 0 : i32
    %c0_i32_1 = arith.constant 0 : i32
    return %c0_i32, %c0_i32_0 : i32, i32
  }
  func.func @transform_2(%arg0: i32) -> (i32, i32) {
    %c0_i32 = arith.constant 0 : i32
    %c0_i32_0 = arith.constant 0 : i32
    %c0_i32_1 = arith.constant 0 : i32
    return %c0_i32, %c0_i32_0 : i32, i32
  }
  func.func @transform_3(%arg0: i32) -> (i32, i32) {
    %c0_i32 = arith.constant 0 : i32
    %c0_i32_0 = arith.constant 0 : i32
    %c0_i32_1 = arith.constant 0 : i32
    return %c0_i32, %c0_i32_0 : i32, i32
  }
  func.func @transform_4(%arg0: i32) -> (i32, i32) {
    %c0_i32 = arith.constant 0 : i32
    %c0_i32_0 = arith.constant 0 : i32
    %c0_i32_1 = arith.constant 0 : i32
    return %c0_i32, %c0_i32_0 : i32, i32
  }
  func.func @transform_5(%arg0: i32) -> (i32, i32) {
    %c0_i32 = arith.constant 0 : i32
    %c0_i32_0 = arith.constant 0 : i32
    return %arg0, %c0_i32 : i32, i32
  }
}

</mosaic_0001>

<llo_original>
// kernel: tpu_custom_call.1
$region0: #{tpu_custom_call.1}
  #allocation0 [shape = 'u32[]', space=smem, size = 0x4, offset = 0x4, fixed_abs, tag = 'smem constant byte address 0x4 - core index']
  #allocation1 [shape = 'u32[72,128]{1,0:T(1,128)}', space=vmem, size = 0x9000, scoped, tag = 'internal scratch']
  %s0 = inlined_call_operand.hbm [shape: f32[16,128], index: 0, kind: input, shape index: {}]
  %s1 = inlined_call_operand.hbm [shape: f32[128,128], index: 1, kind: input, shape index: {}]
  %s2 = inlined_call_operand.vmem [shape: f32[1,128], index: 2, kind: input, shape index: {}]
  %s3 = inlined_call_operand.hbm [shape: f32[128,128], index: 3, kind: input, shape index: {}]
  %s4 = inlined_call_operand.vmem [shape: f32[1,128], index: 4, kind: input, shape index: {}]
  %s5 = inlined_call_operand.hbm [shape: f32[16,128], index: 5, kind: output, shape index: {}]
  %s6 = sld [smem:[#allocation0]]
  $region42: #{tpu_custom_call.1} parent=0
    _
  %s8 = ssub.s32 1, %s6
  %s9 = scalar_select 0, %s8, %s6
  $region1: #{tpu_custom_call.1} parent=0
    #allocation2 [shape = 'u8[8192]{0}', space=vmem, size = 0x2000, scoped, tag = 'input window, operand 0, single buffered']
    #allocation3 [shape = 's32[1]{0}', space=sflag, size = 0x4, scoped, tag = 'scoped memory for tpu_custom_call.1']
    #allocation4 [shape = 's32[1]{0}', space=sflag, size = 0x4, scoped, tag = 'scoped memory for tpu_custom_call.1']
    #allocation5 [shape = 'u8[65536]{0}', space=vmem, size = 0x10000, scoped, tag = 'input window, operand 1, single buffered']
    #allocation6 [shape = 's32[1]{0}', space=sflag, size = 0x4, scoped, tag = 'scoped memory for tpu_custom_call.1']
    #allocation7 [shape = 'u8[65536]{0}', space=vmem, size = 0x10000, scoped, tag = 'input window, operand 3, single buffered']
    #allocation8 [shape = 'u8[8192]{0}', space=vmem, size = 0x2000, scoped, tag = 'output window, operand 0, single buffered']
    %10 = vsyncpa [#allocation3], 0
    %11 = vsyncpa [#allocation6], 0
    %12 = vsyncpa [#allocation4], 0
    // Predicated region
    $region2: #{tpu_custom_call.1} parent=1 // pred_check
      _
    $region3: #{tpu_custom_call.1} parent=1 // pred_check_branch
      %14 = sbr.rel (0) target = $region5
    $region4: #{tpu_custom_call.1} parent=1 // pred_region
      %16 = vsyncadd [#allocation3], 0
      %s17 = sshll.u32 %s0, 4
      %s18 = int_to_ptr.hbm [resolvable:$true] %s17
      %s19 = sshll.u32 [#allocation2], 4
      %s20 = int_to_ptr.vmem [resolvable:$true] %s19
      %25 = dma.hbm_to_vmem [thread:$0]  %s18, 256, %s20, [#allocation3], 128, 128, 8
    $region5: #{tpu_custom_call.1} parent=1 // pred_fallthru
      _
    // Predicated region
    $region6: #{tpu_custom_call.1} parent=1 // pred_check
      _
    $region7: #{tpu_custom_call.1} parent=1 // pred_check_branch
      %27 = sbr.rel (0) target = $region9
    $region8: #{tpu_custom_call.1} parent=1 // pred_region
      %29 = vsyncadd [#allocation6], 0
      %s30 = sshll.u32 %s1, 4
      %s31 = int_to_ptr.hbm [resolvable:$true] %s30
      %s32 = sshll.u32 [#allocation5], 4
      %s33 = int_to_ptr.vmem [resolvable:$true] %s32
      %38 = dma.hbm_to_vmem [thread:$0]  %s31, 2048, %s33, [#allocation6], 128, 128, 8
    $region9: #{tpu_custom_call.1} parent=1 // pred_fallthru
      _
    // Predicated region
    $region10: #{tpu_custom_call.1} parent=1 // pred_check
      _
    $region11: #{tpu_custom_call.1} parent=1 // pred_check_branch
      %40 = sbr.rel (0) target = $region13
    $region12: #{tpu_custom_call.1} parent=1 // pred_region
      _
    $region13: #{tpu_custom_call.1} parent=1 // pred_fallthru
      _
    // Predicated region
    $region14: #{tpu_custom_call.1} parent=1 // pred_check
      _
    $region15: #{tpu_custom_call.1} parent=1 // pred_check_branch
      %42 = sbr.rel (0) target = $region17
    $region16: #{tpu_custom_call.1} parent=1 // pred_region
      %44 = vsyncadd [#allocation6], 0
      %s45 = sshll.u32 %s3, 4
      %s46 = int_to_ptr.hbm [resolvable:$true] %s45
      %s47 = sshll.u32 [#allocation7], 4
      %s48 = int_to_ptr.vmem [resolvable:$true] %s47
      %53 = dma.hbm_to_vmem [thread:$0]  %s46, 2048, %s48, [#allocation6], 128, 128, 8
    $region17: #{tpu_custom_call.1} parent=1 // pred_fallthru
      _
    // Predicated region
    $region18: #{tpu_custom_call.1} parent=1 // pred_check
      _
    $region19: #{tpu_custom_call.1} parent=1 // pred_check_branch
      %55 = sbr.rel (0) target = $region21
    $region20: #{tpu_custom_call.1} parent=1 // pred_region
      _
    $region21: #{tpu_custom_call.1} parent=1 // pred_fallthru
      _
    // Predicated region
    $region22: #{tpu_custom_call.1} parent=1 // pred_check
      _
    $region23: #{tpu_custom_call.1} parent=1 // pred_check_branch
      %57 = sbr.rel (0) target = $region25
    $region24: #{tpu_custom_call.1} parent=1 // pred_region
      %59 = dma.done [#allocation3], 256
    $region25: #{tpu_custom_call.1} parent=1 // pred_fallthru
      _
    // Predicated region
    $region26: #{tpu_custom_call.1} parent=1 // pred_check
      _
    $region27: #{tpu_custom_call.1} parent=1 // pred_check_branch
      %61 = sbr.rel (0) target = $region29
    $region28: #{tpu_custom_call.1} parent=1 // pred_region
      %63 = dma.done [#allocation6], 2048
    $region29: #{tpu_custom_call.1} parent=1 // pred_fallthru
      _
    // Predicated region
    $region30: #{tpu_custom_call.1} parent=1 // pred_check
      _
    $region31: #{tpu_custom_call.1} parent=1 // pred_check_branch
      %65 = sbr.rel (0) target = $region33
    $region32: #{tpu_custom_call.1} parent=1 // pred_region
      %67 = dma.done [#allocation6], 2048
    $region33: #{tpu_custom_call.1} parent=1 // pred_fallthru
      _
    %v68 = vld [vmem:[#allocation2] sm:$0xff]
    %v69 = vld [vmem:[#allocation2 + $0x8] sm:$0xff]
    %v70 = vld [vmem:[#allocation5] sm:$0xff]
    %v71 = vld [vmem:[#allocation5 + $0x8] sm:$0xff]
    %v72 = vld [vmem:[#allocation5 + $0x10] sm:$0xff]
    %v73 = vld [vmem:[#allocation5 + $0x18] sm:$0xff]
    %v74 = vld [vmem:[#allocation5 + $0x20] sm:$0xff]
    %v75 = vld [vmem:[#allocation5 + $0x28] sm:$0xff]
    %v76 = vld [vmem:[#allocation5 + $0x30] sm:$0xff]
    %v77 = vld [vmem:[#allocation5 + $0x38] sm:$0xff]
    %v78 = vld [vmem:[#allocation5 + $0x40] sm:$0xff]
    %v79 = vld [vmem:[#allocation5 + $0x48] sm:$0xff]
    %v80 = vld [vmem:[#allocation5 + $0x50] sm:$0xff]
    %v81 = vld [vmem:[#allocation5 + $0x58] sm:$0xff]
    %v82 = vld [vmem:[#allocation5 + $0x60] sm:$0xff]
    %v83 = vld [vmem:[#allocation5 + $0x68] sm:$0xff]
    %v84 = vld [vmem:[#allocation5 + $0x70] sm:$0xff]
    %v85 = vld [vmem:[#allocation5 + $0x78] sm:$0xff]
    %v86 = vld [vmem:[%s2] sm:$0x1]
    %v88 = vperm.slane %v86, 0
    %90 = vmatpush.msra.mxu0 %v85
    %91 = vmatpush.msra.mxu0 %v84
    %92 = vmatpush.msra.mxu0 %v83
    %93 = vmatpush.msra.mxu0 %v82
    %94 = vmatpush.msra.mxu0 %v81
    %95 = vmatpush.msra.mxu0 %v80
    %96 = vmatpush.msra.mxu0 %v79
    %97 = vmatpush.msra.mxu0 %v78
    %98 = vmatpush.msra.mxu0 %v77
    %99 = vmatpush.msra.mxu0 %v76
    %100 = vmatpush.msra.mxu0 %v75
    %101 = vmatpush.msra.mxu0 %v74
    %102 = vmatpush.msra.mxu0 %v73
    %103 = vmatpush.msra.mxu0 %v72
    %104 = vmatpush.msra.mxu0 %v71
    %105 = vmatpush.msra.mxu0 %v70
    %106 = vmatmul.f32.gmra.mxu0 %v68
    %v107 = vpop.f32.mrf.mxu0
    %v108 = vadd.f32 %v88, %v107
    %109 = vmatmul.f32.gmra.mxu0 %v69
    %v110 = vpop.f32.mrf.mxu0
    %v111 = vadd.f32 %v88, %v110
    %112 = vdwg.mxu0
    %v113 = vmul.f32 %v108, %v108
    %v114 = vmul.f32 %v111, %v111
    %v115 = vmul.f32 %v108, %v113
    %v116 = vmul.f32 %v111, %v114
    %v117 = vmul.f32 %v115, 0.044715
    %v118 = vmul.f32 %v116, 0.044715
    %v119 = vadd.f32 %v108, %v117
    %v120 = vadd.f32 %v111, %v118
    %v121 = vmul.f32 %v119, 0.7978846
    %v122 = vmul.f32 %v120, 0.7978846
    %v123 = vtanh.pop %v121
    %v124 = vtanh.pop %v122
    %v125 = vadd.f32 %v123, 1.0
    %v126 = vadd.f32 %v124, 1.0
    %v127 = vmul.f32 %v125, 0.5
    %v128 = vmul.f32 %v126, 0.5
    %v129 = vmul.f32 %v108, %v127
    %v130 = vmul.f32 %v111, %v128
    %v131 = vld [vmem:[#allocation7] sm:$0xff]
    %v132 = vld [vmem:[#allocation7 + $0x8] sm:$0xff]
    %v133 = vld [vmem:[#allocation7 + $0x10] sm:$0xff]
    %v134 = vld [vmem:[#allocation7 + $0x18] sm:$0xff]
    %v135 = vld [vmem:[#allocation7 + $0x20] sm:$0xff]
    %v136 = vld [vmem:[#allocation7 + $0x28] sm:$0xff]
    %v137 = vld [vmem:[#allocation7 + $0x30] sm:$0xff]
    %v138 = vld [vmem:[#allocation7 + $0x38] sm:$0xff]
    %v139 = vld [vmem:[#allocation7 + $0x40] sm:$0xff]
    %v140 = vld [vmem:[#allocation7 + $0x48] sm:$0xff]
    %v141 = vld [vmem:[#allocation7 + $0x50] sm:$0xff]
    %v142 = vld [vmem:[#allocation7 + $0x58] sm:$0xff]
    %v143 = vld [vmem:[#allocation7 + $0x60] sm:$0xff]
    %v144 = vld [vmem:[#allocation7 + $0x68] sm:$0xff]
    %v145 = vld [vmem:[#allocation7 + $0x70] sm:$0xff]
    %v146 = vld [vmem:[#allocation7 + $0x78] sm:$0xff]
    %v147 = vld [vmem:[%s4] sm:$0x1]
    %v149 = vperm.slane %v147, 0
    %151 = vmatpush.msra.mxu0 %v146
    %152 = vmatpush.msra.mxu0 %v145
    %153 = vmatpush.msra.mxu0 %v144
    %154 = vmatpush.msra.mxu0 %v143
    %155 = vmatpush.msra.mxu0 %v142
    %156 = vmatpush.msra.mxu0 %v141
    %157 = vmatpush.msra.mxu0 %v140
    %158 = vmatpush.msra.mxu0 %v139
    %159 = vmatpush.msra.mxu0 %v138
    %160 = vmatpush.msra.mxu0 %v137
    %161 = vmatpush.msra.mxu0 %v136
    %162 = vmatpush.msra.mxu0 %v135
    %163 = vmatpush.msra.mxu0 %v134
    %164 = vmatpush.msra.mxu0 %v133
    %165 = vmatpush.msra.mxu0 %v132
    %166 = vmatpush.msra.mxu0 %v131
    %167 = vmatmul.f32.gmra.mxu0 %v129
    %v168 = vpop.f32.mrf.mxu0
    %v169 = vadd.f32 %v149, %v168
    %170 = vmatmul.f32.gmra.mxu0 %v130
    %v171 = vpop.f32.mrf.mxu0
    %v172 = vadd.f32 %v149, %v171
    %173 = vdwg.mxu0
    %v174 = vadd.f32 %v169, %v68
    %v175 = vadd.f32 %v172, %v69
    %176 = vst [vmem:[#allocation8] sm:$0xff] %v174
    %177 = vst [vmem:[#allocation8 + $0x8] sm:$0xff] %v175
    // Predicated region
    $region34: #{tpu_custom_call.1} parent=1 // pred_check
      _
    $region35: #{tpu_custom_call.1} parent=1 // pred_check_branch
      %179 = sbr.rel (0) target = $region37
    $region36: #{tpu_custom_call.1} parent=1 // pred_region
      %181 = vsyncadd [#allocation4], 0
      %s182 = sshll.u32 [#allocation8], 4
      %s183 = int_to_ptr.vmem [resolvable:$true] %s182
      %s184 = sshll.u32 %s5, 4
      %s185 = int_to_ptr.hbm [resolvable:$true] %s184
      %190 = dma.vmem_to_hbm [thread:$0]  %s183, 256, %s185, [#allocation4], 128, 128, 8
    $region37: #{tpu_custom_call.1} parent=1 // pred_fallthru
      _
    // Predicated region
    $region38: #{tpu_custom_call.1} parent=1 // pred_check
      _
    $region39: #{tpu_custom_call.1} parent=1 // pred_check_branch
      %192 = sbr.rel (0) target = $region41
    $region40: #{tpu_custom_call.1} parent=1 // pred_region
      %194 = dma.done [#allocation4], 256
    $region41: #{tpu_custom_call.1} parent=1 // pred_fallthru
      _
    %195 = vsyncpa [#allocation3], 1
    %196 = vsyncpa [#allocation6], 1
    %197 = vsyncpa [#allocation4], 1

</llo_original>
